<compile_context>
chip_gen: v5e
topology: v5e:2x2
jax: 0.10.0
libtpu: 0.0.40
codegen_flags: <defaults>
</compile_context>

<pallas_src>
import jax
import jax.numpy as jnp
from jax.experimental import pallas as pl
from jax.experimental.pallas import tpu as pltpu


def bahdanau_kernel(q_ref, enc_ref, w1t_ref, b1_ref, w2t_ref, b2_ref, v_ref,
                    out_ref):
    tb, s = out_ref.shape          # batch tile, full sequence length
    q = q_ref[...]                 # [tb, H]        (compute dtype)
    enc = enc_ref[...]             # [tb*S, H]      (compute dtype, pre-flattened)
    w1t = w1t_ref[...]             # [H, Hp]        pre-transposed + lane-padded
    w2t = w2t_ref[...]             # [H, Hp]
    b1 = b1_ref[...]               # [1, Hp]        f32
    b2 = b2_ref[...]               # [1, Hp]        f32
    v = v_ref[...]                 # [1, Hp]        f32 (zero in padded lanes)

    # W1(query): one small MXU matmul per batch tile, f32 accumulation.
    qh = jnp.dot(q, w1t, preferred_element_type=jnp.float32) + b1          # [tb, Hp]

    # W2(encoder_outputs): single fused [tb*S, H] x [H, Hp] MXU matmul.
    eh = jnp.dot(enc, w2t, preferred_element_type=jnp.float32) + b2        # [tb*S, Hp]

    hp = eh.shape[-1]
    # Free view when Hp % 128 == 0 and S % 8 == 0 (guaranteed by the wrapper for
    # lane-padded Hp; S=8 here). Needed for the per-batch-row query broadcast.
    eh3 = eh.reshape(tb, s, hp)                                            # [tb, S, Hp]

    # energy = tanh(W1 q + W2 enc); tanh in the compute dtype (bf16 EUP on v6e/v7x).
    energy = jnp.tanh((qh[:, None, :] + eh3).astype(q.dtype))              # [tb, S, Hp]

    # V projection as a VPU multiply + lane reduction (no N=1 MXU matmul).
    # The V bias cancels in the softmax and was dropped in the wrapper.
    att = jnp.sum(energy * v, axis=-1)                                     # [tb, S] f32

    # Row-wise softmax over the sequence axis (exact divide; denom is tiny work).
    att_max = jnp.max(att, axis=-1, keepdims=True)
    e = jnp.exp(att - att_max)
    denom = jnp.sum(e, axis=-1, keepdims=True)
    out_ref[...] = (e / denom).astype(out_ref.dtype)


def bahdanau_attention(query, encoder_outputs, params, *,
                       compute_dtype=jnp.bfloat16):
    B, H = query.shape
    _, S, _ = encoder_outputs.shape
    w1, b1, w2, b2, vw, bv = params
    del bv  # constant logit offset -> cancels in softmax

    LANES = 128
    Hp = H if H % LANES == 0 else ((H // LANES) + 1) * LANES

    f32 = jnp.float32

    def pad_cols(x):
        x = jnp.asarray(x, f32)
        if x.shape[-1] == Hp:
            return x
        return jnp.pad(x, ((0, 0), (0, Hp - x.shape[-1])))

    # Weights pre-transposed (in x out) + lane-padded once on the host/XLA side.
    w1t_p = pad_cols(jnp.asarray(w1, f32).T).astype(compute_dtype)   # [H, Hp]
    w2t_p = pad_cols(jnp.asarray(w2, f32).T).astype(compute_dtype)   # [H, Hp]
    b1_p = pad_cols(jnp.asarray(b1, f32).reshape(1, H))              # [1, Hp] f32
    b2_p = pad_cols(jnp.asarray(b2, f32).reshape(1, H))              # [1, Hp] f32
    v_p = pad_cols(jnp.asarray(vw, f32).reshape(1, H))               # [1, Hp] f32

    q_in = jnp.asarray(query, compute_dtype)
    # Flatten in the wrapper: free metadata reshape of the contiguous HBM array.
    enc2d = jnp.asarray(encoder_outputs, compute_dtype).reshape(B * S, H)

    # ---- VMEM-budget-driven batch tile ------------------------------------
    elt = jnp.dtype(compute_dtype).itemsize
    try:
        vmem_cap = int(pltpu.get_tpu_info().vmem_capacity_bytes)
    except Exception:
        vmem_cap = 64 * 1024 * 1024          # v7x per-TensorCore worst case
    vmem_limit = min(int(vmem_cap * 0.75), 100 * 1024 * 1024)

    per_row = (2 * S * H * elt               # enc block, double-buffered
               + 2 * S * Hp * 4              # eh / energy f32 temporaries
               + S * Hp * elt                # bf16 energy temporary
               + 2 * S * 4                   # output block, double-buffered
               + 8 * Hp * 4)                 # qh / bias rows, slack
    fixed = 4 * H * Hp * elt + 8 * Hp * 4    # weights (worst case: double-buffered)
    budget = max(vmem_limit - fixed, per_row)

    sub = 16 if elt < 4 else 8               # sublane granularity of the blocks
    tb_budget = max(1, budget // per_row)
    if tb_budget >= B or B <= sub:
        tb = B
    else:
        tb = max(sub, (min(tb_budget, B) // sub) * sub)
        tb = min(tb, B)
    grid = (pl.cdiv(B, tb),)
    # NOTE: when grid == (1,) on v7x the second TensorCore idles; recovering it
    # needs the S-tiled two-phase-softmax variant described in the header.

    cost = pl.CostEstimate(
        flops=2 * B * S * H * Hp + 2 * B * H * Hp + 2 * B * S * Hp + 4 * B * S,
        transcendentals=B * S * Hp + B * S,
        bytes_accessed=(elt * (B * H + B * S * H + 2 * H * Hp)
                        + 4 * (3 * Hp) + 4 * B * S),
    )

    def build(single_buffer_consts):
        if single_buffer_consts:
            def const(shape):
                return pl.BlockSpec(shape, lambda i: (0, 0),
                                    pipeline_mode=pl.Buffered(1))
        else:
            def const(shape):
                return pl.BlockSpec(shape, lambda i: (0, 0))

        grid_spec = pltpu.PrefetchScalarGridSpec(
            num_scalar_prefetch=0,
            grid=grid,
            in_specs=[
                pl.BlockSpec((tb, H), lambda i: (i, 0)),        # query tile
                pl.BlockSpec((tb * S, H), lambda i: (i, 0)),    # flattened enc tile
                const((H, Hp)),                                 # W1^T  (resident)
                const((1, Hp)),                                 # b1
                const((H, Hp)),                                 # W2^T  (resident)
                const((1, Hp)),                                 # b2
                const((1, Hp)),                                 # V row
            ],
            # Lane-dense 2-D output; the size-1 middle axis is added in the wrapper.
            out_specs=pl.BlockSpec((tb, S), lambda i: (i, 0)),
        )
        return pl.pallas_call(
            bahdanau_kernel,
            out_shape=jax.ShapeDtypeStruct((B, S), jnp.float32),
            grid_spec=grid_spec,
            compiler_params=pltpu.CompilerParams(
                dimension_semantics=("parallel",),
                vmem_limit_bytes=int(vmem_limit)),
            cost_estimate=cost,
        )

    args = (q_in, enc2d, w1t_p, b1_p, w2t_p, b2_p, v_p)
    try:
        out2d = build(single_buffer_consts=True)(*args)
    except Exception:
        # pl.Buffered(1) single-buffering not available on this build; fall back
        # to default double-buffered resident weights (correctness unchanged).
        out2d = build(single_buffer_consts=False)(*args)

    return out2d[:, None, :]  # [B, 1, S]


def reference(query, encoder_outputs, params):
    w1, b1, w2, b2, vw, bv = params
    qh = query @ w1.T + b1[0]                       # [B, H]
    eh = encoder_outputs @ w2.T + b2[0]             # [B, S, H]
    energy = jnp.tanh(qh[:, None, :] + eh)          # [B, S, H]
    att = energy @ vw[0] + bv[0, 0]                 # [B, S]
    return jax.nn.softmax(att, axis=1)[:, None, :]  # [B, 1, S]


if __name__ == "__main__":
    B, S, H = 2, 8, 32

    key = jax.random.PRNGKey(0)
    k_q, k_e, k_w1, k_b1, k_w2, k_b2, k_v, k_bv = jax.random.split(key, 8)

    query = jax.random.normal(k_q, (B, H), dtype=jnp.float32)
    encoder_outputs = jax.random.normal(k_e, (B, S, H), dtype=jnp.float32)

    # Deterministic nn.Linear-style parameters (uniform in +-1/sqrt(fan_in)).
    bound = 1.0 / (H ** 0.5)
    w1 = jax.random.uniform(k_w1, (H, H), jnp.float32, -bound, bound)
    b1 = jax.random.uniform(k_b1, (1, H), jnp.float32, -bound, bound)
    w2 = jax.random.uniform(k_w2, (H, H), jnp.float32, -bound, bound)
    b2 = jax.random.uniform(k_b2, (1, H), jnp.float32, -bound, bound)
    vw = jax.random.uniform(k_v, (1, H), jnp.float32, -bound, bound)
    bv = jax.random.uniform(k_bv, (1, 1), jnp.float32, -bound, bound)
    params = (w1, b1, w2, b2, vw, bv)

    ref = reference(query, encoder_outputs, params)

    # Full-precision path: tight check against the f32 reference.
    out_f32 = bahdanau_attention(query, encoder_outputs, params,
                                 compute_dtype=jnp.float32)
    out_f32 = jax.block_until_ready(out_f32)
    assert out_f32.shape == (B, 1, S)
    assert jnp.allclose(out_f32, ref, rtol=2e-3, atol=1e-5), "f32 kernel mismatch"

    # bf16 MXU/DMA path (production default): looser tolerance for bf16 rounding.
    out_bf16 = bahdanau_attention(query, encoder_outputs, params,
                                  compute_dtype=jnp.bfloat16)
    out_bf16 = jax.block_until_ready(out_bf16)
    assert out_bf16.shape == (B, 1, S)
    assert jnp.allclose(out_bf16, ref, rtol=5e-2, atol=1e-2), "bf16 kernel mismatch"

    print("KERNEL_OK")
</pallas_src>

<mosaic_0001>
module attributes {stable_mosaic.version = 11 : i64} {
  func.func @bahdanau_kernel(%arg0: i32, %arg1: memref<2x32xf32, #tpu.memory_space<vmem>>, %arg2: memref<16x32xf32, #tpu.memory_space<vmem>>, %arg3: memref<32x128xf32, #tpu.memory_space<vmem>>, %arg4: memref<1x128xf32, #tpu.memory_space<vmem>>, %arg5: memref<32x128xf32, #tpu.memory_space<vmem>>, %arg6: memref<1x128xf32, #tpu.memory_space<vmem>>, %arg7: memref<1x128xf32, #tpu.memory_space<vmem>>, %arg8: memref<2x8xf32, #tpu.memory_space<vmem>>) attributes {dimension_semantics = [#tpu.dimension_semantics<parallel>], iteration_bounds = array<i64: 1>, scalar_prefetch = 0 : i64, scratch_operands = 0 : i64, tpu.core_type = #tpu.core_type<tc>, window_params = [{transform_indices = @transform_0, window_bounds = array<i64: 2, 32>}, {transform_indices = @transform_1, window_bounds = array<i64: 16, 32>}, {pipeline_mode = #tpu.pipeline_mode<synchronous>, transform_indices = @transform_2, window_bounds = array<i64: 32, 128>}, {pipeline_mode = #tpu.pipeline_mode<synchronous>, transform_indices = @transform_3, window_bounds = array<i64: 1, 128>}, {pipeline_mode = #tpu.pipeline_mode<synchronous>, transform_indices = @transform_4, window_bounds = array<i64: 32, 128>}, {pipeline_mode = #tpu.pipeline_mode<synchronous>, transform_indices = @transform_5, window_bounds = array<i64: 1, 128>}, {pipeline_mode = #tpu.pipeline_mode<synchronous>, transform_indices = @transform_6, window_bounds = array<i64: 1, 128>}, {transform_indices = @transform_7, window_bounds = array<i64: 2, 8>}]} {
    %c0 = arith.constant 0 : index
    %c0_0 = arith.constant 0 : index
    %0 = vector.load %arg1[%c0, %c0_0] : memref<2x32xf32, #tpu.memory_space<vmem>>, vector<2x32xf32>
    %c0_1 = arith.constant 0 : index
    %c0_2 = arith.constant 0 : index
    %1 = vector.load %arg2[%c0_1, %c0_2] : memref<16x32xf32, #tpu.memory_space<vmem>>, vector<16x32xf32>
    %c0_3 = arith.constant 0 : index
    %c0_4 = arith.constant 0 : index
    %2 = vector.load %arg3[%c0_3, %c0_4] : memref<32x128xf32, #tpu.memory_space<vmem>>, vector<32x128xf32>
    %c0_5 = arith.constant 0 : index
    %c0_6 = arith.constant 0 : index
    %3 = vector.load %arg5[%c0_5, %c0_6] : memref<32x128xf32, #tpu.memory_space<vmem>>, vector<32x128xf32>
    %c0_7 = arith.constant 0 : index
    %c0_8 = arith.constant 0 : index
    %4 = vector.load %arg4[%c0_7, %c0_8] : memref<1x128xf32, #tpu.memory_space<vmem>>, vector<1x128xf32>
    %c0_9 = arith.constant 0 : index
    %c0_10 = arith.constant 0 : index
    %5 = vector.load %arg6[%c0_9, %c0_10] : memref<1x128xf32, #tpu.memory_space<vmem>>, vector<1x128xf32>
    %c0_11 = arith.constant 0 : index
    %c0_12 = arith.constant 0 : index
    %6 = vector.load %arg7[%c0_11, %c0_12] : memref<1x128xf32, #tpu.memory_space<vmem>>, vector<1x128xf32>
    %cst = arith.constant dense<0.000000e+00> : vector<2x128xf32>
    %7 = tpu.matmul %0, %2, %cst {dimension_numbers = #tpu.dot_dimension_numbers<[1], [0], [0], [1], [0, 0, 1, 1], [], []>} : vector<2x32xf32>, vector<32x128xf32>, vector<2x128xf32> -> vector<2x128xf32>
    %8 = vector.broadcast %4 : vector<1x128xf32> to vector<2x128xf32>
    %9 = arith.addf %7, %8 : vector<2x128xf32>
    %cst_13 = arith.constant dense<0.000000e+00> : vector<16x128xf32>
    %10 = tpu.matmul %1, %3, %cst_13 {dimension_numbers = #tpu.dot_dimension_numbers<[1], [0], [0], [1], [0, 0, 1, 1], [], []>} : vector<16x32xf32>, vector<32x128xf32>, vector<16x128xf32> -> vector<16x128xf32>
    %11 = vector.broadcast %5 : vector<1x128xf32> to vector<16x128xf32>
    %12 = arith.addf %10, %11 : vector<16x128xf32>
    %13 = vector.shape_cast %12 : vector<16x128xf32> to vector<2x8x128xf32>
    %14 = vector.shape_cast %9 : vector<2x128xf32> to vector<2x1x128xf32>
    %15 = vector.broadcast %14 : vector<2x1x128xf32> to vector<2x8x128xf32>
    %16 = arith.addf %15, %13 : vector<2x8x128xf32>
    %17 = math.tanh %16 : vector<2x8x128xf32>
    %18 = vector.shape_cast %6 : vector<1x128xf32> to vector<1x1x128xf32>
    %19 = vector.broadcast %18 : vector<1x1x128xf32> to vector<2x8x128xf32>
    %20 = arith.mulf %17, %19 : vector<2x8x128xf32>
    %cst_14 = arith.constant dense<0.000000e+00> : vector<2x8xf32>
    %21 = vector.multi_reduction <add>, %20, %cst_14 [2] : vector<2x8x128xf32> to vector<2x8xf32>
    %cst_15 = arith.constant dense<0xFF800000> : vector<2xf32>
    %22 = vector.multi_reduction <maximumf>, %21, %cst_15 [1] : vector<2x8xf32> to vector<2xf32>
    %23 = vector.shape_cast %22 : vector<2xf32> to vector<2x1xf32>
    %24 = vector.broadcast %23 : vector<2x1xf32> to vector<2x8xf32>
    %25 = arith.subf %21, %24 : vector<2x8xf32>
    %26 = math.exp %25 : vector<2x8xf32>
    %cst_16 = arith.constant dense<0.000000e+00> : vector<2xf32>
    %27 = vector.multi_reduction <add>, %26, %cst_16 [1] : vector<2x8xf32> to vector<2xf32>
    %28 = vector.shape_cast %27 : vector<2xf32> to vector<2x1xf32>
    %29 = vector.broadcast %28 : vector<2x1xf32> to vector<2x8xf32>
    %30 = arith.divf %26, %29 : vector<2x8xf32>
    %c0_17 = arith.constant 0 : index
    %c0_18 = arith.constant 0 : index
    %31 = vector.load %arg8[%c0_17, %c0_18] : memref<2x8xf32, #tpu.memory_space<vmem>>, vector<2x8xf32>
    tpu.vector_store %arg8[%c0_17, %c0_18], %30 {strides = array<i32>} : memref<2x8xf32, #tpu.memory_space<vmem>>, vector<2x8xf32>,
    return
  }
  func.func @transform_0(%arg0: i32) -> (i32, i32) {
    %c0_i32 = arith.constant 0 : i32
    %c0_i32_0 = arith.constant 0 : i32
    return %arg0, %c0_i32 : i32, i32
  }
  func.func @transform_1(%arg0: i32) -> (i32, i32) {
    %c0_i32 = arith.constant 0 : i32
    %c0_i32_0 = arith.constant 0 : i32
    return %arg0, %c0_i32 : i32, i32
  }
  func.func @transform_2(%arg0: i32) -> (i32, i32) {
    %c0_i32 = arith.constant 0 : i32
    %c0_i32_0 = arith.constant 0 : i32
    %c0_i32_1 = arith.constant 0 : i32
    return %c0_i32, %c0_i32_0 : i32, i32
  }
  func.func @transform_3(%arg0: i32) -> (i32, i32) {
    %c0_i32 = arith.constant 0 : i32
    %c0_i32_0 = arith.constant 0 : i32
    %c0_i32_1 = arith.constant 0 : i32
    return %c0_i32, %c0_i32_0 : i32, i32
  }
  func.func @transform_4(%arg0: i32) -> (i32, i32) {
    %c0_i32 = arith.constant 0 : i32
    %c0_i32_0 = arith.constant 0 : i32
    %c0_i32_1 = arith.constant 0 : i32
    return %c0_i32, %c0_i32_0 : i32, i32
  }
  func.func @transform_5(%arg0: i32) -> (i32, i32) {
    %c0_i32 = arith.constant 0 : i32
    %c0_i32_0 = arith.constant 0 : i32
    %c0_i32_1 = arith.constant 0 : i32
    return %c0_i32, %c0_i32_0 : i32, i32
  }
  func.func @transform_6(%arg0: i32) -> (i32, i32) {
    %c0_i32 = arith.constant 0 : i32
    %c0_i32_0 = arith.constant 0 : i32
    %c0_i32_1 = arith.constant 0 : i32
    return %c0_i32, %c0_i32_0 : i32, i32
  }
  func.func @transform_7(%arg0: i32) -> (i32, i32) {
    %c0_i32 = arith.constant 0 : i32
    %c0_i32_0 = arith.constant 0 : i32
    return %arg0, %c0_i32 : i32, i32
  }
}

module attributes {stable_mosaic.version = 11 : i64} {
  func.func @bahdanau_kernel(%arg0: i32, %arg1: memref<2x32xf32, #tpu.memory_space<vmem>>, %arg2: memref<16x32xf32, #tpu.memory_space<vmem>>, %arg3: memref<32x128xf32, #tpu.memory_space<vmem>>, %arg4: memref<1x128xf32, #tpu.memory_space<vmem>>, %arg5: memref<32x128xf32, #tpu.memory_space<vmem>>, %arg6: memref<1x128xf32, #tpu.memory_space<vmem>>, %arg7: memref<1x128xf32, #tpu.memory_space<vmem>>, %arg8: memref<2x8xf32, #tpu.memory_space<vmem>>) attributes {dimension_semantics = [#tpu.dimension_semantics<parallel>], iteration_bounds = array<i64: 1>, scalar_prefetch = 0 : i64, scratch_operands = 0 : i64, tpu.core_type = #tpu.core_type<tc>, window_params = [{transform_indices = @transform_0, window_bounds = array<i64: 2, 32>}, {transform_indices = @transform_1, window_bounds = array<i64: 16, 32>}, {pipeline_mode = #tpu.pipeline_mode<synchronous>, transform_indices = @transform_2, window_bounds = array<i64: 32, 128>}, {pipeline_mode = #tpu.pipeline_mode<synchronous>, transform_indices = @transform_3, window_bounds = array<i64: 1, 128>}, {pipeline_mode = #tpu.pipeline_mode<synchronous>, transform_indices = @transform_4, window_bounds = array<i64: 32, 128>}, {pipeline_mode = #tpu.pipeline_mode<synchronous>, transform_indices = @transform_5, window_bounds = array<i64: 1, 128>}, {pipeline_mode = #tpu.pipeline_mode<synchronous>, transform_indices = @transform_6, window_bounds = array<i64: 1, 128>}, {transform_indices = @transform_7, window_bounds = array<i64: 2, 8>}]} {
    %c0 = arith.constant 0 : index
    %c0_0 = arith.constant 0 : index
    %0 = vector.load %arg1[%c0, %c0_0] : memref<2x32xf32, #tpu.memory_space<vmem>>, vector<2x32xf32>
    %c0_1 = arith.constant 0 : index
    %c0_2 = arith.constant 0 : index
    %1 = vector.load %arg2[%c0_1, %c0_2] : memref<16x32xf32, #tpu.memory_space<vmem>>, vector<16x32xf32>
    %c0_3 = arith.constant 0 : index
    %c0_4 = arith.constant 0 : index
    %2 = vector.load %arg3[%c0_3, %c0_4] : memref<32x128xf32, #tpu.memory_space<vmem>>, vector<32x128xf32>
    %c0_5 = arith.constant 0 : index
    %c0_6 = arith.constant 0 : index
    %3 = vector.load %arg5[%c0_5, %c0_6] : memref<32x128xf32, #tpu.memory_space<vmem>>, vector<32x128xf32>
    %c0_7 = arith.constant 0 : index
    %c0_8 = arith.constant 0 : index
    %4 = vector.load %arg4[%c0_7, %c0_8] : memref<1x128xf32, #tpu.memory_space<vmem>>, vector<1x128xf32>
    %c0_9 = arith.constant 0 : index
    %c0_10 = arith.constant 0 : index
    %5 = vector.load %arg6[%c0_9, %c0_10] : memref<1x128xf32, #tpu.memory_space<vmem>>, vector<1x128xf32>
    %c0_11 = arith.constant 0 : index
    %c0_12 = arith.constant 0 : index
    %6 = vector.load %arg7[%c0_11, %c0_12] : memref<1x128xf32, #tpu.memory_space<vmem>>, vector<1x128xf32>
    %cst = arith.constant dense<0.000000e+00> : vector<2x128xf32>
    %7 = tpu.matmul %0, %2, %cst {dimension_numbers = #tpu.dot_dimension_numbers<[1], [0], [0], [1], [0, 0, 1, 1], [], []>} : vector<2x32xf32>, vector<32x128xf32>, vector<2x128xf32> -> vector<2x128xf32>
    %8 = vector.broadcast %4 : vector<1x128xf32> to vector<2x128xf32>
    %9 = arith.addf %7, %8 : vector<2x128xf32>
    %cst_13 = arith.constant dense<0.000000e+00> : vector<16x128xf32>
    %10 = tpu.matmul %1, %3, %cst_13 {dimension_numbers = #tpu.dot_dimension_numbers<[1], [0], [0], [1], [0, 0, 1, 1], [], []>} : vector<16x32xf32>, vector<32x128xf32>, vector<16x128xf32> -> vector<16x128xf32>
    %11 = vector.broadcast %5 : vector<1x128xf32> to vector<16x128xf32>
    %12 = arith.addf %10, %11 : vector<16x128xf32>
    %13 = vector.shape_cast %12 : vector<16x128xf32> to vector<2x8x128xf32>
    %14 = vector.shape_cast %9 : vector<2x128xf32> to vector<2x1x128xf32>
    %15 = vector.broadcast %14 : vector<2x1x128xf32> to vector<2x8x128xf32>
    %16 = arith.addf %15, %13 : vector<2x8x128xf32>
    %17 = math.tanh %16 : vector<2x8x128xf32>
    %18 = vector.shape_cast %6 : vector<1x128xf32> to vector<1x1x128xf32>
    %19 = vector.broadcast %18 : vector<1x1x128xf32> to vector<2x8x128xf32>
    %20 = arith.mulf %17, %19 : vector<2x8x128xf32>
    %cst_14 = arith.constant dense<0.000000e+00> : vector<2x8xf32>
    %21 = vector.multi_reduction <add>, %20, %cst_14 [2] : vector<2x8x128xf32> to vector<2x8xf32>
    %cst_15 = arith.constant dense<0xFF800000> : vector<2xf32>
    %22 = vector.multi_reduction <maximumf>, %21, %cst_15 [1] : vector<2x8xf32> to vector<2xf32>
    %23 = vector.shape_cast %22 : vector<2xf32> to vector<2x1xf32>
    %24 = vector.broadcast %23 : vector<2x1xf32> to vector<2x8xf32>
    %25 = arith.subf %21, %24 : vector<2x8xf32>
    %26 = math.exp %25 : vector<2x8xf32>
    %cst_16 = arith.constant dense<0.000000e+00> : vector<2xf32>
    %27 = vector.multi_reduction <add>, %26, %cst_16 [1] : vector<2x8xf32> to vector<2xf32>
    %28 = vector.shape_cast %27 : vector<2xf32> to vector<2x1xf32>
    %29 = vector.broadcast %28 : vector<2x1xf32> to vector<2x8xf32>
    %30 = arith.divf %26, %29 : vector<2x8xf32>
    %c0_17 = arith.constant 0 : index
    %c0_18 = arith.constant 0 : index
    %31 = vector.load %arg8[%c0_17, %c0_18] : memref<2x8xf32, #tpu.memory_space<vmem>>, vector<2x8xf32>
    tpu.vector_store %arg8[%c0_17, %c0_18], %30 {strides = array<i32>} : memref<2x8xf32, #tpu.memory_space<vmem>>, vector<2x8xf32>,
    return
  }
  func.func @transform_0(%arg0: i32) -> (i32, i32) {
    %c0_i32 = arith.constant 0 : i32
    %c0_i32_0 = arith.constant 0 : i32
    return %arg0, %c0_i32 : i32, i32
  }
  func.func @transform_1(%arg0: i32) -> (i32, i32) {
    %c0_i32 = arith.constant 0 : i32
    %c0_i32_0 = arith.constant 0 : i32
    return %arg0, %c0_i32 : i32, i32
  }
  func.func @transform_2(%arg0: i32) -> (i32, i32) {
    %c0_i32 = arith.constant 0 : i32
    %c0_i32_0 = arith.constant 0 : i32
    %c0_i32_1 = arith.constant 0 : i32
    return %c0_i32, %c0_i32_0 : i32, i32
  }
  func.func @transform_3(%arg0: i32) -> (i32, i32) {
    %c0_i32 = arith.constant 0 : i32
    %c0_i32_0 = arith.constant 0 : i32
    %c0_i32_1 = arith.constant 0 : i32
    return %c0_i32, %c0_i32_0 : i32, i32
  }
  func.func @transform_4(%arg0: i32) -> (i32, i32) {
    %c0_i32 = arith.constant 0 : i32
    %c0_i32_0 = arith.constant 0 : i32
    %c0_i32_1 = arith.constant 0 : i32
    return %c0_i32, %c0_i32_0 : i32, i32
  }
  func.func @transform_5(%arg0: i32) -> (i32, i32) {
    %c0_i32 = arith.constant 0 : i32
    %c0_i32_0 = arith.constant 0 : i32
    %c0_i32_1 = arith.constant 0 : i32
    return %c0_i32, %c0_i32_0 : i32, i32
  }
  func.func @transform_6(%arg0: i32) -> (i32, i32) {
    %c0_i32 = arith.constant 0 : i32
    %c0_i32_0 = arith.constant 0 : i32
    %c0_i32_1 = arith.constant 0 : i32
    return %c0_i32, %c0_i32_0 : i32, i32
  }
  func.func @transform_7(%arg0: i32) -> (i32, i32) {
    %c0_i32 = arith.constant 0 : i32
    %c0_i32_0 = arith.constant 0 : i32
    return %arg0, %c0_i32 : i32, i32
  }
}

</mosaic_0001>

<llo_original>
// kernel: tpu_custom_call.1
$region0: #{tpu_custom_call.1}
  #allocation0 [shape = 'u32[]', space=smem, size = 0x4, offset = 0x4, fixed_abs, tag = 'smem constant byte address 0x4 - core index']
  #allocation1 [shape = 'u32[72,128]{1,0:T(1,128)}', space=vmem, size = 0x9000, scoped, tag = 'internal scratch']
  %s0 = inlined_call_operand.hbm [shape: f32[2,32], index: 0, kind: input, shape index: {}]
  %s1 = inlined_call_operand.hbm [shape: f32[16,32], index: 1, kind: input, shape index: {}]
  %s2 = inlined_call_operand.hbm [shape: f32[32,128], index: 2, kind: input, shape index: {}]
  %s3 = inlined_call_operand.vmem [shape: f32[1,128], index: 3, kind: input, shape index: {}]
  %s4 = inlined_call_operand.hbm [shape: f32[32,128], index: 4, kind: input, shape index: {}]
  %s5 = inlined_call_operand.vmem [shape: f32[1,128], index: 5, kind: input, shape index: {}]
  %s6 = inlined_call_operand.vmem [shape: f32[1,128], index: 6, kind: input, shape index: {}]
  %s7 = inlined_call_operand.hbm [shape: f32[2,8], index: 7, kind: output, shape index: {}]
  %s8 = sld [smem:[#allocation0]]
  $region54: #{tpu_custom_call.1} parent=0
    _
  %s10 = ssub.s32 1, %s8
  %s11 = scalar_select 0, %s10, %s8
  $region1: #{tpu_custom_call.1} parent=0
    #allocation2 [shape = 'u8[1024]{0}', space=vmem, size = 0x400, scoped, tag = 'input window, operand 0, single buffered']
    #allocation3 [shape = 's32[1]{0}', space=sflag, size = 0x4, scoped, tag = 'scoped memory for tpu_custom_call.1']
    #allocation4 [shape = 's32[1]{0}', space=sflag, size = 0x4, scoped, tag = 'scoped memory for tpu_custom_call.1']
    #allocation5 [shape = 'u8[8192]{0}', space=vmem, size = 0x2000, scoped, tag = 'input window, operand 1, single buffered']
    #allocation6 [shape = 's32[1]{0}', space=sflag, size = 0x4, scoped, tag = 'scoped memory for tpu_custom_call.1']
    #allocation7 [shape = 'u8[16384]{0}', space=vmem, size = 0x4000, scoped, tag = 'input window, operand 2, single buffered']
    #allocation8 [shape = 'u8[16384]{0}', space=vmem, size = 0x4000, scoped, tag = 'input window, operand 4, single buffered']
    #allocation9 [shape = 's32[1]{0}', space=sflag, size = 0x4, scoped, tag = 'scoped memory for tpu_custom_call.1']
    #allocation10 [shape = 'u8[1024]{0}', space=vmem, size = 0x400, scoped, tag = 'output window, operand 0, single buffered']
    %12 = vsyncpa [#allocation3], 0
    %13 = vsyncpa [#allocation6], 0
    %14 = vsyncpa [#allocation9], 0
    %15 = vsyncpa [#allocation4], 0
    // Predicated region
    $region2: #{tpu_custom_call.1} parent=1 // pred_check
      _
    $region3: #{tpu_custom_call.1} parent=1 // pred_check_branch
      %17 = sbr.rel (0) target = $region5
    $region4: #{tpu_custom_call.1} parent=1 // pred_region
      %19 = vsyncadd [#allocation3], 0
      %s21 = sshll.u32 %s0, 4
      %s22 = int_to_ptr.hbm [resolvable:$true] %s21
      %s23 = sshll.u32 [#allocation2], 4
      %s24 = int_to_ptr.vmem [resolvable:$true] %s23
      %26 = dma.hbm_to_vmem [thread:$0]  %s22, 32, %s24, [#allocation3]
    $region5: #{tpu_custom_call.1} parent=1 // pred_fallthru
      _
    // Predicated region
    $region6: #{tpu_custom_call.1} parent=1 // pred_check
      _
    $region7: #{tpu_custom_call.1} parent=1 // pred_check_branch
      %28 = sbr.rel (0) target = $region9
    $region8: #{tpu_custom_call.1} parent=1 // pred_region
      %30 = vsyncadd [#allocation6], 0
      %s31 = sshll.u32 %s1, 4
      %s32 = int_to_ptr.hbm [resolvable:$true] %s31
      %s33 = sshll.u32 [#allocation5], 4
      %s34 = int_to_ptr.vmem [resolvable:$true] %s33
      %39 = dma.hbm_to_vmem [thread:$0]  %s32, 256, %s34, [#allocation6], 128, 128, 8
    $region9: #{tpu_custom_call.1} parent=1 // pred_fallthru
      _
    // Predicated region
    $region10: #{tpu_custom_call.1} parent=1 // pred_check
      _
    $region11: #{tpu_custom_call.1} parent=1 // pred_check_branch
      %41 = sbr.rel (0) target = $region13
    $region12: #{tpu_custom_call.1} parent=1 // pred_region
      %43 = vsyncadd [#allocation6], 0
      %s44 = sshll.u32 %s2, 4
      %s45 = int_to_ptr.hbm [resolvable:$true] %s44
      %s46 = sshll.u32 [#allocation7], 4
      %s47 = int_to_ptr.vmem [resolvable:$true] %s46
      %52 = dma.hbm_to_vmem [thread:$0]  %s45, 512, %s47, [#allocation6], 128, 128, 8
    $region13: #{tpu_custom_call.1} parent=1 // pred_fallthru
      _
    // Predicated region
    $region14: #{tpu_custom_call.1} parent=1 // pred_check
      _
    $region15: #{tpu_custom_call.1} parent=1 // pred_check_branch
      %54 = sbr.rel (0) target = $region17
    $region16: #{tpu_custom_call.1} parent=1 // pred_region
      _
    $region17: #{tpu_custom_call.1} parent=1 // pred_fallthru
      _
    // Predicated region
    $region18: #{tpu_custom_call.1} parent=1 // pred_check
      _
    $region19: #{tpu_custom_call.1} parent=1 // pred_check_branch
      %56 = sbr.rel (0) target = $region21
    $region20: #{tpu_custom_call.1} parent=1 // pred_region
      %58 = vsyncadd [#allocation9], 0
      %s59 = sshll.u32 %s4, 4
      %s60 = int_to_ptr.hbm [resolvable:$true] %s59
      %s61 = sshll.u32 [#allocation8], 4
      %s62 = int_to_ptr.vmem [resolvable:$true] %s61
      %67 = dma.hbm_to_vmem [thread:$0]  %s60, 512, %s62, [#allocation9], 128, 128, 8
    $region21: #{tpu_custom_call.1} parent=1 // pred_fallthru
      _
    // Predicated region
    $region22: #{tpu_custom_call.1} parent=1 // pred_check
      _
    $region23: #{tpu_custom_call.1} parent=1 // pred_check_branch
      %69 = sbr.rel (0) target = $region25
    $region24: #{tpu_custom_call.1} parent=1 // pred_region
      _
    $region25: #{tpu_custom_call.1} parent=1 // pred_fallthru
      _
    // Predicated region
    $region26: #{tpu_custom_call.1} parent=1 // pred_check
      _
    $region27: #{tpu_custom_call.1} parent=1 // pred_check_branch
      %71 = sbr.rel (0) target = $region29
    $region28: #{tpu_custom_call.1} parent=1 // pred_region
      _
    $region29: #{tpu_custom_call.1} parent=1 // pred_fallthru
      _
    // Predicated region
    $region30: #{tpu_custom_call.1} parent=1 // pred_check
      _
    $region31: #{tpu_custom_call.1} parent=1 // pred_check_branch
      %73 = sbr.rel (0) target = $region33
    $region32: #{tpu_custom_call.1} parent=1 // pred_region
      %75 = dma.done [#allocation3], 32
    $region33: #{tpu_custom_call.1} parent=1 // pred_fallthru
      _
    // Predicated region
    $region34: #{tpu_custom_call.1} parent=1 // pred_check
      _
    $region35: #{tpu_custom_call.1} parent=1 // pred_check_branch
      %77 = sbr.rel (0) target = $region37
    $region36: #{tpu_custom_call.1} parent=1 // pred_region
      %79 = dma.done [#allocation6], 256
    $region37: #{tpu_custom_call.1} parent=1 // pred_fallthru
      _
    // Predicated region
    $region38: #{tpu_custom_call.1} parent=1 // pred_check
      _
    $region39: #{tpu_custom_call.1} parent=1 // pred_check_branch
      %81 = sbr.rel (0) target = $region41
    $region40: #{tpu_custom_call.1} parent=1 // pred_region
      %83 = dma.done [#allocation6], 512
    $region41: #{tpu_custom_call.1} parent=1 // pred_fallthru
      _
    // Predicated region
    $region42: #{tpu_custom_call.1} parent=1 // pred_check
      _
    $region43: #{tpu_custom_call.1} parent=1 // pred_check_branch
      %85 = sbr.rel (0) target = $region45
    $region44: #{tpu_custom_call.1} parent=1 // pred_region
      %87 = dma.done [#allocation9], 512
    $region45: #{tpu_custom_call.1} parent=1 // pred_fallthru
      _
    %v88 = vld [vmem:[#allocation2] sm:$0x3]
    %v89 = vld [vmem:[#allocation5] sm:$0xff]
    %v90 = vld [vmem:[#allocation5 + $0x8] sm:$0xff]
    %v91 = vld [vmem:[#allocation7] sm:$0xff]
    %v92 = vld [vmem:[#allocation7 + $0x8] sm:$0xff]
    %v93 = vld [vmem:[#allocation7 + $0x10] sm:$0xff]
    %v94 = vld [vmem:[#allocation7 + $0x18] sm:$0xff]
    %v95 = vld [vmem:[#allocation8] sm:$0xff]
    %v96 = vld [vmem:[#allocation8 + $0x8] sm:$0xff]
    %v97 = vld [vmem:[#allocation8 + $0x10] sm:$0xff]
    %v98 = vld [vmem:[#allocation8 + $0x18] sm:$0xff]
    %v99 = vld [vmem:[%s3] sm:$0x1]
    %v100 = vld [vmem:[%s5] sm:$0x1]
    %v101 = vld [vmem:[%s6] sm:$0x1]
    %v103 = vperm.slane %v99, 0
    %vm105 = vcmask 261120
    %v107 = vsel %vm105, %v88, 0
    %109 = vmatpush.msra.mxu0 0.0
    %110 = vmatpush.msra.mxu0 0.0
    %111 = vmatpush.msra.mxu0 0.0
    %112 = vmatpush.msra.mxu0 0.0
    %113 = vmatpush.msra.mxu0 0.0
    %114 = vmatpush.msra.mxu0 0.0
    %115 = vmatpush.msra.mxu0 0.0
    %116 = vmatpush.msra.mxu0 0.0
    %117 = vmatpush.msra.mxu0 0.0
    %118 = vmatpush.msra.mxu0 0.0
    %119 = vmatpush.msra.mxu0 0.0
    %120 = vmatpush.msra.mxu0 0.0
    %121 = vmatpush.msra.mxu0 %v94
    %122 = vmatpush.msra.mxu0 %v93
    %123 = vmatpush.msra.mxu0 %v92
    %124 = vmatpush.msra.mxu0 %v91
    %125 = vmatmul.f32.gmra.mxu0 %v107
    %v126 = vpop.f32.mrf.mxu0
    %v127 = vadd.f32 %v103, %v126
    %128 = vdwg.mxu0
    %v130 = vperm.slane %v100, 0
    %v133 = vsel %vm105, %v89, 0
    %v136 = vsel %vm105, %v90, 0
    %138 = vmatpush.msra.mxu0 0.0
    %139 = vmatpush.msra.mxu0 0.0
    %140 = vmatpush.msra.mxu0 0.0
    %141 = vmatpush.msra.mxu0 0.0
    %142 = vmatpush.msra.mxu0 0.0
    %143 = vmatpush.msra.mxu0 0.0
    %144 = vmatpush.msra.mxu0 0.0
    %145 = vmatpush.msra.mxu0 0.0
    %146 = vmatpush.msra.mxu0 0.0
    %147 = vmatpush.msra.mxu0 0.0
    %148 = vmatpush.msra.mxu0 0.0
    %149 = vmatpush.msra.mxu0 0.0
    %150 = vmatpush.msra.mxu0 %v98
    %151 = vmatpush.msra.mxu0 %v97
    %152 = vmatpush.msra.mxu0 %v96
    %153 = vmatpush.msra.mxu0 %v95
    %154 = vmatmul.f32.gmra.mxu0 %v133
    %v155 = vpop.f32.mrf.mxu0
    %v156 = vadd.f32 %v130, %v155
    %157 = vmatmul.f32.gmra.mxu0 %v136
    %v158 = vpop.f32.mrf.mxu0
    %v159 = vadd.f32 %v130, %v158
    %160 = vdwg.mxu0
    %v162 = vrot.slane %v127, 1
    %v163 = vperm.slane %v127, 0
    %v164 = vperm.slane %v162, 0
    %v167 = vadd.f32 %v163, %v156
    %v168 = vadd.f32 %v164, %v159
    %v169 = vtanh.pop %v167
    %v170 = vtanh.pop %v168
    %v172 = vperm.slane %v101, 0
    %v174 = vmul.f32 %v169, %v172
    %v175 = vmul.f32 %v170, %v172
    %176 = vadd.xlane.f32.xlu0 %v174
    %v177 = vpop.xlane.xlu0 %176
    %178 = vadd.xlane.f32.xlu0 %v175
    %v179 = vpop.xlane.xlu0 %178
    %v182 = vlaneseq
    %v183 = vand.u32 %v182, 127
    %v184 = vperm.slane %v177, %v183
    %v185 = vperm.slane %v179, %v183
    %vm186 = vcmask 1041409
    %v187 = vsel %vm186, %v185, %v184
    %vm189 = vcmask 58368
    %v190 = vsel %vm189, %v187, -inf
    %191 = vmax.xlane.f32.xlu0 %v190
    %v192 = vpop.xlane.xlu0 %191
    %v194 = vperm.slane %v192, 0
    %v195 = vperm.slane %v192, 1
    %v198 = vsub.f32 %v177, %v194
    %v199 = vsub.f32 %v179, %v195
    %v200 = vmul.f32 %v198, 1.442695
    %v201 = vpow.pop %v200
    %v202 = vmul.f32 %v199, 1.442695
    %v203 = vpow.pop %v202
    %206 = vset.pattern.permute.xlu0 0
    %207 = vperm.xlu0 %206, %v201
    %v208 = vpop.permute.xlu0 %207
    %209 = vset.pattern.permute.xlu0 0
    %210 = vperm.xlu0 %209, %v203
    %v211 = vpop.permute.xlu0 %210
    %v212 = vperm.slane %v208, %v183
    %v213 = vperm.slane %v211, %v183
    %v214 = vsel %vm186, %v213, %v212
    %v216 = vsel %vm189, %v214, 0.0
    %217 = vadd.xlane.f32.xlu0 %v216
    %v218 = vpop.xlane.xlu0 %217
    %v220 = vperm.slane %v218, 0
    %v221 = vperm.slane %v218, 1
    %v224 = vrcp.pop %v220
    %v225 = vmul.f32 %v220, %v224
    %v226 = vsub.f32 1.0, %v225
    %v227 = vmul.f32 %v224, %v226
    %v228 = vadd.f32 %v224, %v227
    %vm229 = vweird.f32 %v220
    %vm230 = vweird.f32 %v224
    %vm231 = vmor %vm229, %vm230
    %v232 = vsel %vm231, %v224, %v228
    %v233 = vand.u32 2147483647, %v220
    %vm234 = vcmp.eq.f32.partialorder %v233, 8.507059e+37
    %v235 = vand.u32 %v220, 2147483648
    %v236 = vor.u32 1.1754944e-38, %v235
    %v237 = vsel %vm234, %v236, %v232
    %v238 = vmul.f32 %v201, %v237
    %v239 = vrcp.pop %v221
    %v240 = vmul.f32 %v221, %v239
    %v241 = vsub.f32 1.0, %v240
    %v242 = vmul.f32 %v239, %v241
    %v243 = vadd.f32 %v239, %v242
    %vm244 = vweird.f32 %v221
    %vm245 = vweird.f32 %v239
    %vm246 = vmor %vm244, %vm245
    %v247 = vsel %vm246, %v239, %v243
    %v248 = vand.u32 2147483647, %v221
    %vm249 = vcmp.eq.f32.partialorder %v248, 8.507059e+37
    %v250 = vand.u32 %v221, 2147483648
    %v251 = vor.u32 1.1754944e-38, %v250
    %v252 = vsel %vm249, %v251, %v247
    %v253 = vmul.f32 %v203, %v252
    %256 = vset.pattern.permute.xlu0 0
    %257 = vperm.xlu0 %256, %v238
    %v258 = vpop.permute.xlu0 %257
    %259 = vset.pattern.permute.xlu0 0
    %260 = vperm.xlu0 %259, %v253
    %v261 = vpop.permute.xlu0 %260
    %v262 = vperm.slane %v258, %v183
    %v263 = vperm.slane %v261, %v183
    %v264 = vsel %vm186, %v263, %v262
    %266 = vst.msk [vmem:[#allocation10] sm:$0x3] %vm189, %v264
    // Predicated region
    $region46: #{tpu_custom_call.1} parent=1 // pred_check
      _
    $region47: #{tpu_custom_call.1} parent=1 // pred_check_branch
      %268 = sbr.rel (0) target = $region49
    $region48: #{tpu_custom_call.1} parent=1 // pred_region
      %270 = vsyncadd [#allocation4], 0
      %s272 = sshll.u32 [#allocation10], 4
      %s273 = int_to_ptr.vmem [resolvable:$true] %s272
      %s274 = sshll.u32 %s7, 4
      %s275 = int_to_ptr.hbm [resolvable:$true] %s274
      %277 = dma.vmem_to_hbm [thread:$0]  %s273, 32, %s275, [#allocation4]
    $region49: #{tpu_custom_call.1} parent=1 // pred_fallthru
      _
    // Predicated region
    $region50: #{tpu_custom_call.1} parent=1 // pred_check
      _
    $region51: #{tpu_custom_call.1} parent=1 // pred_check_branch
      %279 = sbr.rel (0) target = $region53
    $region52: #{tpu_custom_call.1} parent=1 // pred_region
      %281 = dma.done [#allocation4], 32
    $region53: #{tpu_custom_call.1} parent=1 // pred_fallthru
      _
    %282 = vsyncpa [#allocation3], 1
    %283 = vsyncpa [#allocation6], 1
    %284 = vsyncpa [#allocation9], 1
    %285 = vsyncpa [#allocation4], 1

// kernel: tpu_custom_call.1
$region0: #{tpu_custom_call.1}
  #allocation0 [shape = 'u32[]', space=smem, size = 0x4, offset = 0x4, fixed_abs, tag = 'smem constant byte address 0x4 - core index']
  #allocation1 [shape = 'u32[72,128]{1,0:T(1,128)}', space=vmem, size = 0x9000, scoped, tag = 'internal scratch']
  %s0 = inlined_call_operand.hbm [shape: f32[2,32], index: 0, kind: input, shape index: {}]
  %s1 = inlined_call_operand.hbm [shape: f32[16,32], index: 1, kind: input, shape index: {}]
  %s2 = inlined_call_operand.hbm [shape: f32[32,128], index: 2, kind: input, shape index: {}]
  %s3 = inlined_call_operand.vmem [shape: f32[1,128], index: 3, kind: input, shape index: {}]
  %s4 = inlined_call_operand.hbm [shape: f32[32,128], index: 4, kind: input, shape index: {}]
  %s5 = inlined_call_operand.vmem [shape: f32[1,128], index: 5, kind: input, shape index: {}]
  %s6 = inlined_call_operand.vmem [shape: f32[1,128], index: 6, kind: input, shape index: {}]
  %s7 = inlined_call_operand.hbm [shape: f32[2,8], index: 7, kind: output, shape index: {}]
  %s8 = sld [smem:[#allocation0]]
  $region54: #{tpu_custom_call.1} parent=0
    _
  %s10 = ssub.s32 1, %s8
  %s11 = scalar_select 0, %s10, %s8
  $region1: #{tpu_custom_call.1} parent=0
    #allocation2 [shape = 'u8[1024]{0}', space=vmem, size = 0x400, scoped, tag = 'input window, operand 0, single buffered']
    #allocation3 [shape = 's32[1]{0}', space=sflag, size = 0x4, scoped, tag = 'scoped memory for tpu_custom_call.1']
    #allocation4 [shape = 's32[1]{0}', space=sflag, size = 0x4, scoped, tag = 'scoped memory for tpu_custom_call.1']
    #allocation5 [shape = 'u8[8192]{0}', space=vmem, size = 0x2000, scoped, tag = 'input window, operand 1, single buffered']
    #allocation6 [shape = 's32[1]{0}', space=sflag, size = 0x4, scoped, tag = 'scoped memory for tpu_custom_call.1']
    #allocation7 [shape = 'u8[16384]{0}', space=vmem, size = 0x4000, scoped, tag = 'input window, operand 2, single buffered']
    #allocation8 [shape = 'u8[16384]{0}', space=vmem, size = 0x4000, scoped, tag = 'input window, operand 4, single buffered']
    #allocation9 [shape = 's32[1]{0}', space=sflag, size = 0x4, scoped, tag = 'scoped memory for tpu_custom_call.1']
    #allocation10 [shape = 'u8[1024]{0}', space=vmem, size = 0x400, scoped, tag = 'output window, operand 0, single buffered']
    %12 = vsyncpa [#allocation3], 0
    %13 = vsyncpa [#allocation6], 0
    %14 = vsyncpa [#allocation9], 0
    %15 = vsyncpa [#allocation4], 0
    // Predicated region
    $region2: #{tpu_custom_call.1} parent=1 // pred_check
      _
    $region3: #{tpu_custom_call.1} parent=1 // pred_check_branch
      %17 = sbr.rel (0) target = $region5
    $region4: #{tpu_custom_call.1} parent=1 // pred_region
      %19 = vsyncadd [#allocation3], 0
      %s21 = sshll.u32 %s0, 4
      %s22 = int_to_ptr.hbm [resolvable:$true] %s21
      %s23 = sshll.u32 [#allocation2], 4
      %s24 = int_to_ptr.vmem [resolvable:$true] %s23
      %26 = dma.hbm_to_vmem [thread:$0]  %s22, 32, %s24, [#allocation3]
    $region5: #{tpu_custom_call.1} parent=1 // pred_fallthru
      _
    // Predicated region
    $region6: #{tpu_custom_call.1} parent=1 // pred_check
      _
    $region7: #{tpu_custom_call.1} parent=1 // pred_check_branch
      %28 = sbr.rel (0) target = $region9
    $region8: #{tpu_custom_call.1} parent=1 // pred_region
      %30 = vsyncadd [#allocation6], 0
      %s31 = sshll.u32 %s1, 4
      %s32 = int_to_ptr.hbm [resolvable:$true] %s31
      %s33 = sshll.u32 [#allocation5], 4
      %s34 = int_to_ptr.vmem [resolvable:$true] %s33
      %39 = dma.hbm_to_vmem [thread:$0]  %s32, 256, %s34, [#allocation6], 128, 128, 8
    $region9: #{tpu_custom_call.1} parent=1 // pred_fallthru
      _
    // Predicated region
    $region10: #{tpu_custom_call.1} parent=1 // pred_check
      _
    $region11: #{tpu_custom_call.1} parent=1 // pred_check_branch
      %41 = sbr.rel (0) target = $region13
    $region12: #{tpu_custom_call.1} parent=1 // pred_region
      %43 = vsyncadd [#allocation6], 0
      %s44 = sshll.u32 %s2, 4
      %s45 = int_to_ptr.hbm [resolvable:$true] %s44
      %s46 = sshll.u32 [#allocation7], 4
      %s47 = int_to_ptr.vmem [resolvable:$true] %s46
      %52 = dma.hbm_to_vmem [thread:$0]  %s45, 512, %s47, [#allocation6], 128, 128, 8
    $region13: #{tpu_custom_call.1} parent=1 // pred_fallthru
      _
    // Predicated region
    $region14: #{tpu_custom_call.1} parent=1 // pred_check
      _
    $region15: #{tpu_custom_call.1} parent=1 // pred_check_branch
      %54 = sbr.rel (0) target = $region17
    $region16: #{tpu_custom_call.1} parent=1 // pred_region
      _
    $region17: #{tpu_custom_call.1} parent=1 // pred_fallthru
      _
    // Predicated region
    $region18: #{tpu_custom_call.1} parent=1 // pred_check
      _
    $region19: #{tpu_custom_call.1} parent=1 // pred_check_branch
      %56 = sbr.rel (0) target = $region21
    $region20: #{tpu_custom_call.1} parent=1 // pred_region
      %58 = vsyncadd [#allocation9], 0
      %s59 = sshll.u32 %s4, 4
      %s60 = int_to_ptr.hbm [resolvable:$true] %s59
      %s61 = sshll.u32 [#allocation8], 4
      %s62 = int_to_ptr.vmem [resolvable:$true] %s61
      %67 = dma.hbm_to_vmem [thread:$0]  %s60, 512, %s62, [#allocation9], 128, 128, 8
    $region21: #{tpu_custom_call.1} parent=1 // pred_fallthru
      _
    // Predicated region
    $region22: #{tpu_custom_call.1} parent=1 // pred_check
      _
    $region23: #{tpu_custom_call.1} parent=1 // pred_check_branch
      %69 = sbr.rel (0) target = $region25
    $region24: #{tpu_custom_call.1} parent=1 // pred_region
      _
    $region25: #{tpu_custom_call.1} parent=1 // pred_fallthru
      _
    // Predicated region
    $region26: #{tpu_custom_call.1} parent=1 // pred_check
      _
    $region27: #{tpu_custom_call.1} parent=1 // pred_check_branch
      %71 = sbr.rel (0) target = $region29
    $region28: #{tpu_custom_call.1} parent=1 // pred_region
      _
    $region29: #{tpu_custom_call.1} parent=1 // pred_fallthru
      _
    // Predicated region
    $region30: #{tpu_custom_call.1} parent=1 // pred_check
      _
    $region31: #{tpu_custom_call.1} parent=1 // pred_check_branch
      %73 = sbr.rel (0) target = $region33
    $region32: #{tpu_custom_call.1} parent=1 // pred_region
      %75 = dma.done [#allocation3], 32
    $region33: #{tpu_custom_call.1} parent=1 // pred_fallthru
      _
    // Predicated region
    $region34: #{tpu_custom_call.1} parent=1 // pred_check
      _
    $region35: #{tpu_custom_call.1} parent=1 // pred_check_branch
      %77 = sbr.rel (0) target = $region37
    $region36: #{tpu_custom_call.1} parent=1 // pred_region
      %79 = dma.done [#allocation6], 256
    $region37: #{tpu_custom_call.1} parent=1 // pred_fallthru
      _
    // Predicated region
    $region38: #{tpu_custom_call.1} parent=1 // pred_check
      _
    $region39: #{tpu_custom_call.1} parent=1 // pred_check_branch
      %81 = sbr.rel (0) target = $region41
    $region40: #{tpu_custom_call.1} parent=1 // pred_region
      %83 = dma.done [#allocation6], 512
    $region41: #{tpu_custom_call.1} parent=1 // pred_fallthru
      _
    // Predicated region
    $region42: #{tpu_custom_call.1} parent=1 // pred_check
      _
    $region43: #{tpu_custom_call.1} parent=1 // pred_check_branch
      %85 = sbr.rel (0) target = $region45
    $region44: #{tpu_custom_call.1} parent=1 // pred_region
      %87 = dma.done [#allocation9], 512
    $region45: #{tpu_custom_call.1} parent=1 // pred_fallthru
      _
    %v88 = vld [vmem:[#allocation2] sm:$0x3]
    %v89 = vld [vmem:[#allocation5] sm:$0xff]
    %v90 = vld [vmem:[#allocation5 + $0x8] sm:$0xff]
    %v91 = vld [vmem:[#allocation7] sm:$0xff]
    %v92 = vld [vmem:[#allocation7 + $0x8] sm:$0xff]
    %v93 = vld [vmem:[#allocation7 + $0x10] sm:$0xff]
    %v94 = vld [vmem:[#allocation7 + $0x18] sm:$0xff]
    %v95 = vld [vmem:[#allocation8] sm:$0xff]
    %v96 = vld [vmem:[#allocation8 + $0x8] sm:$0xff]
    %v97 = vld [vmem:[#allocation8 + $0x10] sm:$0xff]
    %v98 = vld [vmem:[#allocation8 + $0x18] sm:$0xff]
    %v99 = vld [vmem:[%s3] sm:$0x1]
    %v100 = vld [vmem:[%s5] sm:$0x1]
    %v101 = vld [vmem:[%s6] sm:$0x1]
    %v103 = vperm.slane %v99, 0
    %vm105 = vcmask 261120
    %v107 = vsel %vm105, %v88, 0
    %109 = vmatpush.msra.mxu0 0.0
    %110 = vmatpush.msra.mxu0 0.0
    %111 = vmatpush.msra.mxu0 0.0
    %112 = vmatpush.msra.mxu0 0.0
    %113 = vmatpush.msra.mxu0 0.0
    %114 = vmatpush.msra.mxu0 0.0
    %115 = vmatpush.msra.mxu0 0.0
    %116 = vmatpush.msra.mxu0 0.0
    %117 = vmatpush.msra.mxu0 0.0
    %118 = vmatpush.msra.mxu0 0.0
    %119 = vmatpush.msra.mxu0 0.0
    %120 = vmatpush.msra.mxu0 0.0
    %121 = vmatpush.msra.mxu0 %v94
    %122 = vmatpush.msra.mxu0 %v93
    %123 = vmatpush.msra.mxu0 %v92
    %124 = vmatpush.msra.mxu0 %v91
    %125 = vmatmul.f32.gmra.mxu0 %v107
    %v126 = vpop.f32.mrf.mxu0
    %v127 = vadd.f32 %v103, %v126
    %128 = vdwg.mxu0
    %v130 = vperm.slane %v100, 0
    %v133 = vsel %vm105, %v89, 0
    %v136 = vsel %vm105, %v90, 0
    %138 = vmatpush.msra.mxu0 0.0
    %139 = vmatpush.msra.mxu0 0.0
    %140 = vmatpush.msra.mxu0 0.0
    %141 = vmatpush.msra.mxu0 0.0
    %142 = vmatpush.msra.mxu0 0.0
    %143 = vmatpush.msra.mxu0 0.0
    %144 = vmatpush.msra.mxu0 0.0
    %145 = vmatpush.msra.mxu0 0.0
    %146 = vmatpush.msra.mxu0 0.0
    %147 = vmatpush.msra.mxu0 0.0
    %148 = vmatpush.msra.mxu0 0.0
    %149 = vmatpush.msra.mxu0 0.0
    %150 = vmatpush.msra.mxu0 %v98
    %151 = vmatpush.msra.mxu0 %v97
    %152 = vmatpush.msra.mxu0 %v96
    %153 = vmatpush.msra.mxu0 %v95
    %154 = vmatmul.f32.gmra.mxu0 %v133
    %v155 = vpop.f32.mrf.mxu0
    %v156 = vadd.f32 %v130, %v155
    %157 = vmatmul.f32.gmra.mxu0 %v136
    %v158 = vpop.f32.mrf.mxu0
    %v159 = vadd.f32 %v130, %v158
    %160 = vdwg.mxu0
    %v162 = vrot.slane %v127, 1
    %v163 = vperm.slane %v127, 0
    %v164 = vperm.slane %v162, 0
    %v167 = vadd.f32 %v163, %v156
    %v168 = vadd.f32 %v164, %v159
    %v169 = vtanh.pop %v167
    %v170 = vtanh.pop %v168
    %v172 = vperm.slane %v101, 0
    %v174 = vmul.f32 %v169, %v172
    %v175 = vmul.f32 %v170, %v172
    %176 = vadd.xlane.f32.xlu0 %v174
    %v177 = vpop.xlane.xlu0 %176
    %178 = vadd.xlane.f32.xlu0 %v175
    %v179 = vpop.xlane.xlu0 %178
    %v182 = vlaneseq
    %v183 = vand.u32 %v182, 127
    %v184 = vperm.slane %v177, %v183
    %v185 = vperm.slane %v179, %v183
    %vm186 = vcmask 1041409
    %v187 = vsel %vm186, %v185, %v184
    %vm189 = vcmask 58368
    %v190 = vsel %vm189, %v187, -inf
    %191 = vmax.xlane.f32.xlu0 %v190
    %v192 = vpop.xlane.xlu0 %191
    %v194 = vperm.slane %v192, 0
    %v195 = vperm.slane %v192, 1
    %v198 = vsub.f32 %v177, %v194
    %v199 = vsub.f32 %v179, %v195
    %v200 = vmul.f32 %v198, 1.442695
    %v201 = vpow.pop %v200
    %v202 = vmul.f32 %v199, 1.442695
    %v203 = vpow.pop %v202
    %206 = vset.pattern.permute.xlu0 0
    %207 = vperm.xlu0 %206, %v201
    %v208 = vpop.permute.xlu0 %207
    %209 = vset.pattern.permute.xlu0 0
    %210 = vperm.xlu0 %209, %v203
    %v211 = vpop.permute.xlu0 %210
    %v212 = vperm.slane %v208, %v183
    %v213 = vperm.slane %v211, %v183
    %v214 = vsel %vm186, %v213, %v212
    %v216 = vsel %vm189, %v214, 0.0
    %217 = vadd.xlane.f32.xlu0 %v216
    %v218 = vpop.xlane.xlu0 %217
    %v220 = vperm.slane %v218, 0
    %v221 = vperm.slane %v218, 1
    %v224 = vrcp.pop %v220
    %v225 = vmul.f32 %v220, %v224
    %v226 = vsub.f32 1.0, %v225
    %v227 = vmul.f32 %v224, %v226
    %v228 = vadd.f32 %v224, %v227
    %vm229 = vweird.f32 %v220
    %vm230 = vweird.f32 %v224
    %vm231 = vmor %vm229, %vm230
    %v232 = vsel %vm231, %v224, %v228
    %v233 = vand.u32 2147483647, %v220
    %vm234 = vcmp.eq.f32.partialorder %v233, 8.507059e+37
    %v235 = vand.u32 %v220, 2147483648
    %v236 = vor.u32 1.1754944e-38, %v235
    %v237 = vsel %vm234, %v236, %v232
    %v238 = vmul.f32 %v201, %v237
    %v239 = vrcp.pop %v221
    %v240 = vmul.f32 %v221, %v239
    %v241 = vsub.f32 1.0, %v240
    %v242 = vmul.f32 %v239, %v241
    %v243 = vadd.f32 %v239, %v242
    %vm244 = vweird.f32 %v221
    %vm245 = vweird.f32 %v239
    %vm246 = vmor %vm244, %vm245
    %v247 = vsel %vm246, %v239, %v243
    %v248 = vand.u32 2147483647, %v221
    %vm249 = vcmp.eq.f32.partialorder %v248, 8.507059e+37
    %v250 = vand.u32 %v221, 2147483648
    %v251 = vor.u32 1.1754944e-38, %v250
    %v252 = vsel %vm249, %v251, %v247
    %v253 = vmul.f32 %v203, %v252
    %256 = vset.pattern.permute.xlu0 0
    %257 = vperm.xlu0 %256, %v238
    %v258 = vpop.permute.xlu0 %257
    %259 = vset.pattern.permute.xlu0 0
    %260 = vperm.xlu0 %259, %v253
    %v261 = vpop.permute.xlu0 %260
    %v262 = vperm.slane %v258, %v183
    %v263 = vperm.slane %v261, %v183
    %v264 = vsel %vm186, %v263, %v262
    %266 = vst.msk [vmem:[#allocation10] sm:$0x3] %vm189, %v264
    // Predicated region
    $region46: #{tpu_custom_call.1} parent=1 // pred_check
      _
    $region47: #{tpu_custom_call.1} parent=1 // pred_check_branch
      %268 = sbr.rel (0) target = $region49
    $region48: #{tpu_custom_call.1} parent=1 // pred_region
      %270 = vsyncadd [#allocation4], 0
      %s272 = sshll.u32 [#allocation10], 4
      %s273 = int_to_ptr.vmem [resolvable:$true] %s272
      %s274 = sshll.u32 %s7, 4
      %s275 = int_to_ptr.hbm [resolvable:$true] %s274
      %277 = dma.vmem_to_hbm [thread:$0]  %s273, 32, %s275, [#allocation4]
    $region49: #{tpu_custom_call.1} parent=1 // pred_fallthru
      _
    // Predicated region
    $region50: #{tpu_custom_call.1} parent=1 // pred_check
      _
    $region51: #{tpu_custom_call.1} parent=1 // pred_check_branch
      %279 = sbr.rel (0) target = $region53
    $region52: #{tpu_custom_call.1} parent=1 // pred_region
      %281 = dma.done [#allocation4], 32
    $region53: #{tpu_custom_call.1} parent=1 // pred_fallthru
      _
    %282 = vsyncpa [#allocation3], 1
    %283 = vsyncpa [#allocation6], 1
    %284 = vsyncpa [#allocation9], 1
    %285 = vsyncpa [#allocation4], 1

</llo_original>
